<compile_context>
chip_gen: v5e
topology: v5e:2x2
jax: 0.10.0
libtpu: 0.0.40
codegen_flags: <defaults>
</compile_context>

<pallas_src>
import jax
import jax.numpy as jnp
from jax.experimental import pallas as pl
from jax.experimental.pallas import tpu as pltpu

_LAYER_DIMS = [(21 * 3, 60), (60, 40), (40, 30), (30, 25)]  # (fan_in, fan_out)
_N_LAYERS = len(_LAYER_DIMS)
_PAD = 128                      # padded feature width for every hidden layer
_IN_DIM = _LAYER_DIMS[0][0]     # 63
_OUT_DIM = _LAYER_DIMS[-1][1]   # 25


def _hand_landmark_kernel(x_ref, w_ref, b_ref, o_ref, xpad_ref):
    """Fused (linear -> relu) x3 -> linear -> sigmoid on one [TB, 63] batch tile.

    x_ref    : [TB, 63]       f32   (unpadded input tile)
    w_ref    : [4, 128, 128]  bf16  (zero-padded weight slab, VMEM-resident)
    b_ref    : [8, 128]       f32   (rows 0..3 hold biases, padded cols zero)
    o_ref    : [TB, 25]       f32   (narrow lane output, no wrapper slice)
    xpad_ref : [TB, 128]      f32   (VMEM scratch for the 63 -> 128 lane pad)
    """
    # 63 -> 128 lane zero-pad done entirely in VMEM. Re-zeroed every tile
    # (cheap VMEM-only store) so the pad lanes are guaranteed zero on every
    # TensorCore / grid step.
    xpad_ref[...] = jnp.zeros_like(xpad_ref)
    xpad_ref[:, 0:_IN_DIM] = x_ref[...]
    h = xpad_ref[...].astype(jnp.bfloat16)            # bf16 only at MXU boundary
    for i in range(_N_LAYERS - 1):
        z = jnp.dot(h, w_ref[i], preferred_element_type=jnp.float32)
        z = z + b_ref[i:i + 1, :]
        h = jnp.maximum(z, 0.0).astype(jnp.bfloat16)  # ReLU in f32, recast for MXU
    z = jnp.dot(h, w_ref[_N_LAYERS - 1], preferred_element_type=jnp.float32)
    z = z + b_ref[_N_LAYERS - 1:_N_LAYERS, :]
    # Only the 25 real output columns are stored (masked vst on the last tile).
    o_ref[...] = jax.nn.sigmoid(z[:, :_OUT_DIM]).astype(o_ref.dtype)


def pack_params(params):
    """Pack per-layer [in,out] weights / [1,out] biases into two padded slabs."""
    w_slab = jnp.zeros((_N_LAYERS, _PAD, _PAD), jnp.float32)
    b_slab = jnp.zeros((8, _PAD), jnp.float32)
    for i, (fan_in, fan_out) in enumerate(_LAYER_DIMS):
        w_slab = w_slab.at[i, :fan_in, :fan_out].set(params[f"w{i + 1}"])
        b_slab = b_slab.at[i, :fan_out].set(params[f"b{i + 1}"][0])
    return w_slab.astype(jnp.bfloat16), b_slab        # bf16 MXU operands, f32 bias


def hand_landmark_forward(x, w_slab, b_slab, *, block_rows=1024):
    """x: [B, 63] f32. Returns [B, 25] f32 (sigmoid outputs)."""
    B = x.shape[0]
    # Block first dim must be a multiple of 8 OR equal the full array dim.
    TB = B if B <= block_rows else block_rows
    grid = pl.cdiv(B, TB)
    n_rows = grid * TB

    # Advisory cost: bytes / flops actually moved & computed (padded shapes).
    flops = 2 * n_rows * _N_LAYERS * _PAD * _PAD
    transcendentals = n_rows * _PAD
    bytes_accessed = (n_rows * _IN_DIM * 4 + n_rows * _OUT_DIM * 4
                      + w_slab.size * 2 + b_slab.size * 4)

    # NOTE: at TB=1024 the double-buffered I/O tiles + slabs + scratch are
    # ~2 MiB, well inside every generation's default scoped VMEM. If block_rows
    # is pushed past ~4096 (v5e: 16 MiB default scoped VMEM), also set
    # vmem_limit_bytes in CompilerParams.
    return pl.pallas_call(
        _hand_landmark_kernel,
        out_shape=jax.ShapeDtypeStruct((B, _OUT_DIM), jnp.float32),
        grid=(grid,),
        in_specs=[
            # Batch-tiled activations, streamed / double-buffered per grid step;
            # last dim 63 equals the full array dim (no HBM-side lane pad).
            pl.BlockSpec((TB, _IN_DIM), lambda i: (i, 0)),
            # Constant index_map -> weight & bias slabs stay VMEM-resident.
            pl.BlockSpec((_N_LAYERS, _PAD, _PAD), lambda i: (0, 0, 0)),
            pl.BlockSpec((8, _PAD), lambda i: (0, 0)),
        ],
        # Narrow-lane output (25 == full array dim): only real columns are
        # written back and no post-kernel slice pass is needed.
        out_specs=pl.BlockSpec((TB, _OUT_DIM), lambda i: (i, 0)),
        scratch_shapes=[pltpu.VMEM((TB, _PAD), jnp.float32)],
        compiler_params=pltpu.CompilerParams(
            dimension_semantics=("parallel",)),        # megacore split on v7x
        cost_estimate=pl.CostEstimate(
            flops=flops,
            transcendentals=transcendentals,
            bytes_accessed=bytes_accessed),
    )(x, w_slab, b_slab)


def init_params(key):
    """Deterministic init matching nn.Linear (stored transposed: [in, out])."""
    params = {}
    for i, (fan_in, fan_out) in enumerate(_LAYER_DIMS, start=1):
        key, kw, kb = jax.random.split(key, 3)
        bound = 1.0 / jnp.sqrt(fan_in)
        params[f"w{i}"] = jax.random.uniform(
            kw, (fan_in, fan_out), jnp.float32, -bound, bound)
        params[f"b{i}"] = jax.random.uniform(
            kb, (1, fan_out), jnp.float32, -bound, bound)
    return params


def reference_forward(x, params):
    """Pure-JAX f32 reference of the PyTorch forward for verification."""
    h = x
    for i in range(1, 4):
        h = jnp.maximum(h @ params[f"w{i}"] + params[f"b{i}"], 0.0)
    h = h @ params["w4"] + params["b4"]
    return jax.nn.sigmoid(h)


if __name__ == "__main__":
    key = jax.random.PRNGKey(0)
    key_p, key_x = jax.random.split(key)

    params = init_params(key_p)
    w_slab, b_slab = pack_params(params)

    # Small batch of hand landmarks: 8 samples x (21 keypoints * 3 coords).
    x = jax.random.normal(key_x, (8, 21 * 3), dtype=jnp.float32)

    out = jax.block_until_ready(hand_landmark_forward(x, w_slab, b_slab))
    ref = reference_forward(x, params)

    assert out.shape == (8, 25), out.shape
    # bf16 MXU operands -> compare against the f32 reference with a tolerance
    # appropriate for bf16 matmul inputs (outputs are sigmoid-bounded in [0,1]).
    max_err = float(jnp.max(jnp.abs(out - ref)))
    assert max_err < 2e-2, f"mismatch vs reference: max abs err {max_err}"

    print("KERNEL_OK")
</pallas_src>

<mosaic_0001>
module attributes {stable_mosaic.version = 11 : i64} {
  func.func @_hand_landmark_kernel(%arg0: i32, %arg1: memref<8x63xf32, #tpu.memory_space<vmem>>, %arg2: memref<4x128x128xbf16, #tpu.memory_space<vmem>>, %arg3: memref<8x128xf32, #tpu.memory_space<vmem>>, %arg4: memref<8x25xf32, #tpu.memory_space<vmem>>, %arg5: memref<8x128xf32, #tpu.memory_space<vmem>>) attributes {dimension_semantics = [#tpu.dimension_semantics<parallel>], iteration_bounds = array<i64: 1>, scalar_prefetch = 0 : i64, scratch_operands = 1 : i64, tpu.core_type = #tpu.core_type<tc>, window_params = [{transform_indices = @transform_0, window_bounds = array<i64: 8, 63>}, {pipeline_mode = #tpu.pipeline_mode<synchronous>, transform_indices = @transform_1, window_bounds = array<i64: 4, 128, 128>}, {pipeline_mode = #tpu.pipeline_mode<synchronous>, transform_indices = @transform_2, window_bounds = array<i64: 8, 128>}, {transform_indices = @transform_3, window_bounds = array<i64: 8, 25>}]} {
    %cst = arith.constant 0.000000e+00 : f32
    %0 = vector.broadcast %cst : f32 to vector<8x128xf32>
    %c0 = arith.constant 0 : index
    %c0_0 = arith.constant 0 : index
    %1 = vector.load %arg5[%c0, %c0_0] : memref<8x128xf32, #tpu.memory_space<vmem>>, vector<8x128xf32>
    tpu.vector_store %arg5[%c0, %c0_0], %0 {strides = array<i32>} : memref<8x128xf32, #tpu.memory_space<vmem>>, vector<8x128xf32>,
    %c0_1 = arith.constant 0 : index
    %c0_2 = arith.constant 0 : index
    %2 = vector.load %arg1[%c0_1, %c0_2] : memref<8x63xf32, #tpu.memory_space<vmem>>, vector<8x63xf32>
    %c0_3 = arith.constant 0 : index
    %c0_4 = arith.constant 0 : index
    %3 = vector.load %arg5[%c0_3, %c0_4] : memref<8x128xf32, #tpu.memory_space<vmem>>, vector<8x63xf32>
    tpu.vector_store %arg5[%c0_3, %c0_4], %2 {strides = array<i32>} : memref<8x128xf32, #tpu.memory_space<vmem>>, vector<8x63xf32>,
    %c0_5 = arith.constant 0 : index
    %c0_6 = arith.constant 0 : index
    %4 = vector.load %arg5[%c0_5, %c0_6] : memref<8x128xf32, #tpu.memory_space<vmem>>, vector<8x128xf32>
    %5 = arith.truncf %4 : vector<8x128xf32> to vector<8x128xbf16>
    %c0_7 = arith.constant 0 : index
    %c0_8 = arith.constant 0 : index
    %c0_9 = arith.constant 0 : index
    %6 = vector.load %arg2[%c0_7, %c0_8, %c0_9] : memref<4x128x128xbf16, #tpu.memory_space<vmem>>, vector<1x128x128xbf16>
    %7 = vector.shape_cast %6 : vector<1x128x128xbf16> to vector<128x128xbf16>
    %cst_10 = arith.constant dense<0.000000e+00> : vector<8x128xf32>
    %8 = tpu.matmul %5, %7, %cst_10 {dimension_numbers = #tpu.dot_dimension_numbers<[1], [0], [0], [1], [0, 0, 1, 1], [], []>} : vector<8x128xbf16>, vector<128x128xbf16>, vector<8x128xf32> -> vector<8x128xf32>
    %c0_11 = arith.constant 0 : index
    %c0_12 = arith.constant 0 : index
    %9 = vector.load %arg3[%c0_11, %c0_12] : memref<8x128xf32, #tpu.memory_space<vmem>>, vector<1x128xf32>
    %10 = vector.broadcast %9 : vector<1x128xf32> to vector<8x128xf32>
    %11 = arith.addf %8, %10 : vector<8x128xf32>
    %cst_13 = arith.constant 0.000000e+00 : f32
    %12 = vector.broadcast %cst_13 : f32 to vector<8x128xf32>
    %13 = arith.maximumf %11, %12 : vector<8x128xf32>
    %14 = arith.truncf %13 : vector<8x128xf32> to vector<8x128xbf16>
    %c1 = arith.constant 1 : index
    %c0_14 = arith.constant 0 : index
    %c0_15 = arith.constant 0 : index
    %15 = vector.load %arg2[%c1, %c0_14, %c0_15] : memref<4x128x128xbf16, #tpu.memory_space<vmem>>, vector<1x128x128xbf16>
    %16 = vector.shape_cast %15 : vector<1x128x128xbf16> to vector<128x128xbf16>
    %cst_16 = arith.constant dense<0.000000e+00> : vector<8x128xf32>
    %17 = tpu.matmul %14, %16, %cst_16 {dimension_numbers = #tpu.dot_dimension_numbers<[1], [0], [0], [1], [0, 0, 1, 1], [], []>} : vector<8x128xbf16>, vector<128x128xbf16>, vector<8x128xf32> -> vector<8x128xf32>
    %c1_17 = arith.constant 1 : index
    %c0_18 = arith.constant 0 : index
    %18 = vector.load %arg3[%c1_17, %c0_18] : memref<8x128xf32, #tpu.memory_space<vmem>>, vector<1x128xf32>
    %19 = vector.broadcast %18 : vector<1x128xf32> to vector<8x128xf32>
    %20 = arith.addf %17, %19 : vector<8x128xf32>
    %cst_19 = arith.constant 0.000000e+00 : f32
    %21 = vector.broadcast %cst_19 : f32 to vector<8x128xf32>
    %22 = arith.maximumf %20, %21 : vector<8x128xf32>
    %23 = arith.truncf %22 : vector<8x128xf32> to vector<8x128xbf16>
    %c2 = arith.constant 2 : index
    %c0_20 = arith.constant 0 : index
    %c0_21 = arith.constant 0 : index
    %24 = vector.load %arg2[%c2, %c0_20, %c0_21] : memref<4x128x128xbf16, #tpu.memory_space<vmem>>, vector<1x128x128xbf16>
    %25 = vector.shape_cast %24 : vector<1x128x128xbf16> to vector<128x128xbf16>
    %cst_22 = arith.constant dense<0.000000e+00> : vector<8x128xf32>
    %26 = tpu.matmul %23, %25, %cst_22 {dimension_numbers = #tpu.dot_dimension_numbers<[1], [0], [0], [1], [0, 0, 1, 1], [], []>} : vector<8x128xbf16>, vector<128x128xbf16>, vector<8x128xf32> -> vector<8x128xf32>
    %c2_23 = arith.constant 2 : index
    %c0_24 = arith.constant 0 : index
    %27 = vector.load %arg3[%c2_23, %c0_24] : memref<8x128xf32, #tpu.memory_space<vmem>>, vector<1x128xf32>
    %28 = vector.broadcast %27 : vector<1x128xf32> to vector<8x128xf32>
    %29 = arith.addf %26, %28 : vector<8x128xf32>
    %cst_25 = arith.constant 0.000000e+00 : f32
    %30 = vector.broadcast %cst_25 : f32 to vector<8x128xf32>
    %31 = arith.maximumf %29, %30 : vector<8x128xf32>
    %32 = arith.truncf %31 : vector<8x128xf32> to vector<8x128xbf16>
    %c3 = arith.constant 3 : index
    %c0_26 = arith.constant 0 : index
    %c0_27 = arith.constant 0 : index
    %33 = vector.load %arg2[%c3, %c0_26, %c0_27] : memref<4x128x128xbf16, #tpu.memory_space<vmem>>, vector<1x128x128xbf16>
    %34 = vector.shape_cast %33 : vector<1x128x128xbf16> to vector<128x128xbf16>
    %cst_28 = arith.constant dense<0.000000e+00> : vector<8x128xf32>
    %35 = tpu.matmul %32, %34, %cst_28 {dimension_numbers = #tpu.dot_dimension_numbers<[1], [0], [0], [1], [0, 0, 1, 1], [], []>} : vector<8x128xbf16>, vector<128x128xbf16>, vector<8x128xf32> -> vector<8x128xf32>
    %c3_29 = arith.constant 3 : index
    %c0_30 = arith.constant 0 : index
    %36 = vector.load %arg3[%c3_29, %c0_30] : memref<8x128xf32, #tpu.memory_space<vmem>>, vector<1x128xf32>
    %37 = vector.broadcast %36 : vector<1x128xf32> to vector<8x128xf32>
    %38 = arith.addf %35, %37 : vector<8x128xf32>
    %39 = vector.extract_strided_slice %38 {offsets = [0, 0], sizes = [8, 25], strides = [1, 1]} : vector<8x128xf32> to vector<8x25xf32>
    %40 = arith.negf %39 : vector<8x25xf32>
    %41 = math.exp %40 : vector<8x25xf32>
    %cst_31 = arith.constant 1.000000e+00 : f32
    %42 = vector.broadcast %cst_31 : f32 to vector<8x25xf32>
    %43 = arith.addf %42, %41 : vector<8x25xf32>
    %44 = arith.divf %42, %43 : vector<8x25xf32>
    %c0_32 = arith.constant 0 : index
    %c0_33 = arith.constant 0 : index
    %45 = vector.load %arg4[%c0_32, %c0_33] : memref<8x25xf32, #tpu.memory_space<vmem>>, vector<8x25xf32>
    tpu.vector_store %arg4[%c0_32, %c0_33], %44 {strides = array<i32>} : memref<8x25xf32, #tpu.memory_space<vmem>>, vector<8x25xf32>,
    return
  }
  func.func @transform_0(%arg0: i32) -> (i32, i32) {
    %c0_i32 = arith.constant 0 : i32
    %c0_i32_0 = arith.constant 0 : i32
    return %arg0, %c0_i32 : i32, i32
  }
  func.func @transform_1(%arg0: i32) -> (i32, i32, i32) {
    %c0_i32 = arith.constant 0 : i32
    %c0_i32_0 = arith.constant 0 : i32
    %c0_i32_1 = arith.constant 0 : i32
    %c0_i32_2 = arith.constant 0 : i32
    return %c0_i32, %c0_i32_0, %c0_i32_1 : i32, i32, i32
  }
  func.func @transform_2(%arg0: i32) -> (i32, i32) {
    %c0_i32 = arith.constant 0 : i32
    %c0_i32_0 = arith.constant 0 : i32
    %c0_i32_1 = arith.constant 0 : i32
    return %c0_i32, %c0_i32_0 : i32, i32
  }
  func.func @transform_3(%arg0: i32) -> (i32, i32) {
    %c0_i32 = arith.constant 0 : i32
    %c0_i32_0 = arith.constant 0 : i32
    return %arg0, %c0_i32 : i32, i32
  }
}

</mosaic_0001>

<llo_original>
// kernel: tpu_custom_call.1
$region0: #{tpu_custom_call.1}
  #allocation0 [shape = 'u32[]', space=smem, size = 0x4, offset = 0x4, fixed_abs, tag = 'smem constant byte address 0x4 - core index']
  #allocation1 [shape = 'u32[72,128]{1,0:T(1,128)}', space=vmem, size = 0x9000, scoped, tag = 'internal scratch']
  #allocation2 [shape = 'f32[8,128]{1,0:T(8,128)}', space=vmem, size = 0x1000, scoped, tag = 'scratch operand']
  %s0 = inlined_call_operand.hbm [shape: f32[8,63], index: 0, kind: input, shape index: {}]
  %s1 = inlined_call_operand.hbm [shape: bf16[4,128,128], index: 1, kind: input, shape index: {}]
  %s2 = inlined_call_operand.hbm [shape: f32[8,128], index: 2, kind: input, shape index: {}]
  %s3 = inlined_call_operand.hbm [shape: f32[8,25], index: 3, kind: output, shape index: {}]
  %s4 = sld [smem:[#allocation0]]
  $region34: #{tpu_custom_call.1} parent=0
    _
  %s6 = ssub.s32 1, %s4
  %s7 = scalar_select 0, %s6, %s4
  $region1: #{tpu_custom_call.1} parent=0
    #allocation3 [shape = 'u8[4096]{0}', space=vmem, size = 0x1000, scoped, tag = 'input window, operand 0, single buffered']
    #allocation4 [shape = 's32[1]{0}', space=sflag, size = 0x4, scoped, tag = 'scoped memory for tpu_custom_call.1']
    #allocation5 [shape = 's32[1]{0}', space=sflag, size = 0x4, scoped, tag = 'scoped memory for tpu_custom_call.1']
    #allocation6 [shape = 'u8[131072]{0}', space=vmem, size = 0x20000, scoped, tag = 'input window, operand 1, single buffered']
    #allocation7 [shape = 's32[1]{0}', space=sflag, size = 0x4, scoped, tag = 'scoped memory for tpu_custom_call.1']
    #allocation8 [shape = 'u8[4096]{0}', space=vmem, size = 0x1000, scoped, tag = 'input window, operand 2, single buffered']
    #allocation9 [shape = 'u8[4096]{0}', space=vmem, size = 0x1000, scoped, tag = 'output window, operand 0, single buffered']
    %8 = vsyncpa [#allocation4], 0
    %9 = vsyncpa [#allocation7], 0
    %10 = vsyncpa [#allocation5], 0
    // Predicated region
    $region2: #{tpu_custom_call.1} parent=1 // pred_check
      _
    $region3: #{tpu_custom_call.1} parent=1 // pred_check_branch
      %12 = sbr.rel (0) target = $region5
    $region4: #{tpu_custom_call.1} parent=1 // pred_region
      %14 = vsyncadd [#allocation4], 0
      %s16 = sshll.u32 %s0, 4
      %s17 = int_to_ptr.hbm [resolvable:$true] %s16
      %s18 = sshll.u32 [#allocation3], 4
      %s19 = int_to_ptr.vmem [resolvable:$true] %s18
      %21 = dma.hbm_to_vmem [thread:$0]  %s17, 128, %s19, [#allocation4]
    $region5: #{tpu_custom_call.1} parent=1 // pred_fallthru
      _
    // Predicated region
    $region6: #{tpu_custom_call.1} parent=1 // pred_check
      _
    $region7: #{tpu_custom_call.1} parent=1 // pred_check_branch
      %23 = sbr.rel (0) target = $region9
    $region8: #{tpu_custom_call.1} parent=1 // pred_region
      %25 = vsyncadd [#allocation7], 0
      %s26 = sshll.u32 %s1, 4
      %s27 = int_to_ptr.hbm [resolvable:$true] %s26
      %s28 = sshll.u32 [#allocation6], 4
      %s29 = int_to_ptr.vmem [resolvable:$true] %s28
      %34 = dma.hbm_to_vmem [thread:$0]  %s27, 4096, %s29, [#allocation7], 64, 64, 4
    $region9: #{tpu_custom_call.1} parent=1 // pred_fallthru
      _
    // Predicated region
    $region10: #{tpu_custom_call.1} parent=1 // pred_check
      _
    $region11: #{tpu_custom_call.1} parent=1 // pred_check_branch
      %36 = sbr.rel (0) target = $region13
    $region12: #{tpu_custom_call.1} parent=1 // pred_region
      %38 = vsyncadd [#allocation7], 0
      %s40 = sshll.u32 %s2, 4
      %s41 = int_to_ptr.hbm [resolvable:$true] %s40
      %s42 = sshll.u32 [#allocation8], 4
      %s43 = int_to_ptr.vmem [resolvable:$true] %s42
      %45 = dma.hbm_to_vmem [thread:$0]  %s41, 128, %s43, [#allocation7]
    $region13: #{tpu_custom_call.1} parent=1 // pred_fallthru
      _
    // Predicated region
    $region14: #{tpu_custom_call.1} parent=1 // pred_check
      _
    $region15: #{tpu_custom_call.1} parent=1 // pred_check_branch
      %47 = sbr.rel (0) target = $region17
    $region16: #{tpu_custom_call.1} parent=1 // pred_region
      %49 = dma.done [#allocation4], 128
    $region17: #{tpu_custom_call.1} parent=1 // pred_fallthru
      _
    // Predicated region
    $region18: #{tpu_custom_call.1} parent=1 // pred_check
      _
    $region19: #{tpu_custom_call.1} parent=1 // pred_check_branch
      %51 = sbr.rel (0) target = $region21
    $region20: #{tpu_custom_call.1} parent=1 // pred_region
      %53 = dma.done [#allocation7], 4096
    $region21: #{tpu_custom_call.1} parent=1 // pred_fallthru
      _
    // Predicated region
    $region22: #{tpu_custom_call.1} parent=1 // pred_check
      _
    $region23: #{tpu_custom_call.1} parent=1 // pred_check_branch
      %55 = sbr.rel (0) target = $region25
    $region24: #{tpu_custom_call.1} parent=1 // pred_region
      %57 = dma.done [#allocation7], 128
    $region25: #{tpu_custom_call.1} parent=1 // pred_fallthru
      _
    %58 = vst [vmem:[#allocation2] sm:$0xff] 0.0
    %v59 = vld [vmem:[#allocation3] sm:$0xff]
    %vm60 = vcmask 515072
    %61 = vst.msk [vmem:[#allocation2] sm:$0xff] %vm60, %v59
    %v62 = vld [vmem:[#allocation2] sm:$0xff]
    %v63 = vpack.c.bf16 %v62, %v62
    %v64 = vld [vmem:[#allocation6] sm:$0xf]
    %v65 = vld [vmem:[#allocation6 + $0x4] sm:$0xf]
    %v66 = vld [vmem:[#allocation6 + $0x8] sm:$0xf]
    %v67 = vld [vmem:[#allocation6 + $0xc] sm:$0xf]
    %v68 = vld [vmem:[#allocation6 + $0x10] sm:$0xf]
    %v69 = vld [vmem:[#allocation6 + $0x14] sm:$0xf]
    %v70 = vld [vmem:[#allocation6 + $0x18] sm:$0xf]
    %v71 = vld [vmem:[#allocation6 + $0x1c] sm:$0xf]
    %v72 = vld [vmem:[#allocation6 + $0x20] sm:$0xf]
    %v73 = vld [vmem:[#allocation6 + $0x24] sm:$0xf]
    %v74 = vld [vmem:[#allocation6 + $0x28] sm:$0xf]
    %v75 = vld [vmem:[#allocation6 + $0x2c] sm:$0xf]
    %v76 = vld [vmem:[#allocation6 + $0x30] sm:$0xf]
    %v77 = vld [vmem:[#allocation6 + $0x34] sm:$0xf]
    %v78 = vld [vmem:[#allocation6 + $0x38] sm:$0xf]
    %v79 = vld [vmem:[#allocation6 + $0x3c] sm:$0xf]
    %v80 = vld [vmem:[#allocation8] sm:$0x1]
    %v81 = vperm.slane %v80, 0
    %v98 = vunpack.c.l.b16 %v64
    %v99 = vunpack.c.l.b16 %v65
    %v100 = vunpack.c.l.b16 %v66
    %v101 = vunpack.c.l.b16 %v67
    %v102 = vunpack.c.l.b16 %v68
    %v103 = vunpack.c.l.b16 %v69
    %v104 = vunpack.c.l.b16 %v70
    %v105 = vunpack.c.l.b16 %v71
    %v106 = vunpack.c.l.b16 %v72
    %v107 = vunpack.c.l.b16 %v73
    %v108 = vunpack.c.l.b16 %v74
    %v109 = vunpack.c.l.b16 %v75
    %v110 = vunpack.c.l.b16 %v76
    %v111 = vunpack.c.l.b16 %v77
    %v112 = vunpack.c.l.b16 %v78
    %v113 = vunpack.c.l.b16 %v79
    %v114 = vpack.c.b16 %v99, %v98
    %v115 = vpack.c.b16 %v101, %v100
    %v116 = vpack.c.b16 %v103, %v102
    %v117 = vpack.c.b16 %v105, %v104
    %v118 = vpack.c.b16 %v107, %v106
    %v119 = vpack.c.b16 %v109, %v108
    %v120 = vpack.c.b16 %v111, %v110
    %v121 = vpack.c.b16 %v113, %v112
    %130 = vmatpush.bf16.msra.mxu0 %v121
    %131 = vmatpush.bf16.msra.mxu0 %v120
    %132 = vmatpush.bf16.msra.mxu0 %v119
    %133 = vmatpush.bf16.msra.mxu0 %v118
    %134 = vmatpush.bf16.msra.mxu0 %v117
    %135 = vmatpush.bf16.msra.mxu0 %v116
    %136 = vmatpush.bf16.msra.mxu0 %v115
    %137 = vmatpush.bf16.msra.mxu0 %v114
    %138 = vmatmul.bf16.gmra.mxu0 %v63
    %v139 = vpop.f32.mrf.mxu0
    %v140 = vadd.f32 %v81, %v139
    %v141 = vpop.f32.mrf.mxu0
    %142 = vdwg.mxu0
    %v143 = vmax.f32 %v140, 0.0
    %v144 = vpack.c.bf16 %v143, %v143
    %s145 = scalar_lea.vmem [#allocation6], 64
    %v146 = vld [vmem:[%s145] sm:$0xf]
    %v147 = vld [vmem:[%s145 + $0x4] sm:$0xf]
    %v148 = vld [vmem:[%s145 + $0x8] sm:$0xf]
    %v149 = vld [vmem:[%s145 + $0xc] sm:$0xf]
    %v150 = vld [vmem:[%s145 + $0x10] sm:$0xf]
    %v151 = vld [vmem:[%s145 + $0x14] sm:$0xf]
    %v152 = vld [vmem:[%s145 + $0x18] sm:$0xf]
    %v153 = vld [vmem:[%s145 + $0x1c] sm:$0xf]
    %v154 = vld [vmem:[%s145 + $0x20] sm:$0xf]
    %v155 = vld [vmem:[%s145 + $0x24] sm:$0xf]
    %v156 = vld [vmem:[%s145 + $0x28] sm:$0xf]
    %v157 = vld [vmem:[%s145 + $0x2c] sm:$0xf]
    %v158 = vld [vmem:[%s145 + $0x30] sm:$0xf]
    %v159 = vld [vmem:[%s145 + $0x34] sm:$0xf]
    %v160 = vld [vmem:[%s145 + $0x38] sm:$0xf]
    %v161 = vld [vmem:[%s145 + $0x3c] sm:$0xf]
    %v162 = vld [vmem:[#allocation8 + $0x1] sm:$0x1]
    %v163 = vperm.slane %v162, 0
    %v180 = vunpack.c.l.b16 %v146
    %v181 = vunpack.c.l.b16 %v147
    %v182 = vunpack.c.l.b16 %v148
    %v183 = vunpack.c.l.b16 %v149
    %v184 = vunpack.c.l.b16 %v150
    %v185 = vunpack.c.l.b16 %v151
    %v186 = vunpack.c.l.b16 %v152
    %v187 = vunpack.c.l.b16 %v153
    %v188 = vunpack.c.l.b16 %v154
    %v189 = vunpack.c.l.b16 %v155
    %v190 = vunpack.c.l.b16 %v156
    %v191 = vunpack.c.l.b16 %v157
    %v192 = vunpack.c.l.b16 %v158
    %v193 = vunpack.c.l.b16 %v159
    %v194 = vunpack.c.l.b16 %v160
    %v195 = vunpack.c.l.b16 %v161
    %v196 = vpack.c.b16 %v181, %v180
    %v197 = vpack.c.b16 %v183, %v182
    %v198 = vpack.c.b16 %v185, %v184
    %v199 = vpack.c.b16 %v187, %v186
    %v200 = vpack.c.b16 %v189, %v188
    %v201 = vpack.c.b16 %v191, %v190
    %v202 = vpack.c.b16 %v193, %v192
    %v203 = vpack.c.b16 %v195, %v194
    %212 = vmatpush.bf16.msra.mxu0 %v203
    %213 = vmatpush.bf16.msra.mxu0 %v202
    %214 = vmatpush.bf16.msra.mxu0 %v201
    %215 = vmatpush.bf16.msra.mxu0 %v200
    %216 = vmatpush.bf16.msra.mxu0 %v199
    %217 = vmatpush.bf16.msra.mxu0 %v198
    %218 = vmatpush.bf16.msra.mxu0 %v197
    %219 = vmatpush.bf16.msra.mxu0 %v196
    %220 = vmatmul.bf16.gmra.mxu0 %v144
    %v221 = vpop.f32.mrf.mxu0
    %v222 = vadd.f32 %v163, %v221
    %v223 = vpop.f32.mrf.mxu0
    %224 = vdwg.mxu0
    %v225 = vmax.f32 %v222, 0.0
    %v226 = vpack.c.bf16 %v225, %v225
    %s227 = scalar_lea.vmem [#allocation6], 128
    %v228 = vld [vmem:[%s227] sm:$0xf]
    %v229 = vld [vmem:[%s227 + $0x4] sm:$0xf]
    %v230 = vld [vmem:[%s227 + $0x8] sm:$0xf]
    %v231 = vld [vmem:[%s227 + $0xc] sm:$0xf]
    %v232 = vld [vmem:[%s227 + $0x10] sm:$0xf]
    %v233 = vld [vmem:[%s227 + $0x14] sm:$0xf]
    %v234 = vld [vmem:[%s227 + $0x18] sm:$0xf]
    %v235 = vld [vmem:[%s227 + $0x1c] sm:$0xf]
    %v236 = vld [vmem:[%s227 + $0x20] sm:$0xf]
    %v237 = vld [vmem:[%s227 + $0x24] sm:$0xf]
    %v238 = vld [vmem:[%s227 + $0x28] sm:$0xf]
    %v239 = vld [vmem:[%s227 + $0x2c] sm:$0xf]
    %v240 = vld [vmem:[%s227 + $0x30] sm:$0xf]
    %v241 = vld [vmem:[%s227 + $0x34] sm:$0xf]
    %v242 = vld [vmem:[%s227 + $0x38] sm:$0xf]
    %v243 = vld [vmem:[%s227 + $0x3c] sm:$0xf]
    %v244 = vld [vmem:[#allocation8 + $0x2] sm:$0x1]
    %v245 = vperm.slane %v244, 0
    %v262 = vunpack.c.l.b16 %v228
    %v263 = vunpack.c.l.b16 %v229
    %v264 = vunpack.c.l.b16 %v230
    %v265 = vunpack.c.l.b16 %v231
    %v266 = vunpack.c.l.b16 %v232
    %v267 = vunpack.c.l.b16 %v233
    %v268 = vunpack.c.l.b16 %v234
    %v269 = vunpack.c.l.b16 %v235
    %v270 = vunpack.c.l.b16 %v236
    %v271 = vunpack.c.l.b16 %v237
    %v272 = vunpack.c.l.b16 %v238
    %v273 = vunpack.c.l.b16 %v239
    %v274 = vunpack.c.l.b16 %v240
    %v275 = vunpack.c.l.b16 %v241
    %v276 = vunpack.c.l.b16 %v242
    %v277 = vunpack.c.l.b16 %v243
    %v278 = vpack.c.b16 %v263, %v262
    %v279 = vpack.c.b16 %v265, %v264
    %v280 = vpack.c.b16 %v267, %v266
    %v281 = vpack.c.b16 %v269, %v268
    %v282 = vpack.c.b16 %v271, %v270
    %v283 = vpack.c.b16 %v273, %v272
    %v284 = vpack.c.b16 %v275, %v274
    %v285 = vpack.c.b16 %v277, %v276
    %294 = vmatpush.bf16.msra.mxu0 %v285
    %295 = vmatpush.bf16.msra.mxu0 %v284
    %296 = vmatpush.bf16.msra.mxu0 %v283
    %297 = vmatpush.bf16.msra.mxu0 %v282
    %298 = vmatpush.bf16.msra.mxu0 %v281
    %299 = vmatpush.bf16.msra.mxu0 %v280
    %300 = vmatpush.bf16.msra.mxu0 %v279
    %301 = vmatpush.bf16.msra.mxu0 %v278
    %302 = vmatmul.bf16.gmra.mxu0 %v226
    %v303 = vpop.f32.mrf.mxu0
    %v304 = vadd.f32 %v245, %v303
    %v305 = vpop.f32.mrf.mxu0
    %306 = vdwg.mxu0
    %v307 = vmax.f32 %v304, 0.0
    %v308 = vpack.c.bf16 %v307, %v307
    %s309 = scalar_lea.vmem [#allocation6], 192
    %v310 = vld [vmem:[%s309] sm:$0xf]
    %v311 = vld [vmem:[%s309 + $0x4] sm:$0xf]
    %v312 = vld [vmem:[%s309 + $0x8] sm:$0xf]
    %v313 = vld [vmem:[%s309 + $0xc] sm:$0xf]
    %v314 = vld [vmem:[%s309 + $0x10] sm:$0xf]
    %v315 = vld [vmem:[%s309 + $0x14] sm:$0xf]
    %v316 = vld [vmem:[%s309 + $0x18] sm:$0xf]
    %v317 = vld [vmem:[%s309 + $0x1c] sm:$0xf]
    %v318 = vld [vmem:[%s309 + $0x20] sm:$0xf]
    %v319 = vld [vmem:[%s309 + $0x24] sm:$0xf]
    %v320 = vld [vmem:[%s309 + $0x28] sm:$0xf]
    %v321 = vld [vmem:[%s309 + $0x2c] sm:$0xf]
    %v322 = vld [vmem:[%s309 + $0x30] sm:$0xf]
    %v323 = vld [vmem:[%s309 + $0x34] sm:$0xf]
    %v324 = vld [vmem:[%s309 + $0x38] sm:$0xf]
    %v325 = vld [vmem:[%s309 + $0x3c] sm:$0xf]
    %v326 = vld [vmem:[#allocation8 + $0x3] sm:$0x1]
    %v327 = vperm.slane %v326, 0
    %v344 = vunpack.c.l.b16 %v310
    %v345 = vunpack.c.l.b16 %v311
    %v346 = vunpack.c.l.b16 %v312
    %v347 = vunpack.c.l.b16 %v313
    %v348 = vunpack.c.l.b16 %v314
    %v349 = vunpack.c.l.b16 %v315
    %v350 = vunpack.c.l.b16 %v316
    %v351 = vunpack.c.l.b16 %v317
    %v352 = vunpack.c.l.b16 %v318
    %v353 = vunpack.c.l.b16 %v319
    %v354 = vunpack.c.l.b16 %v320
    %v355 = vunpack.c.l.b16 %v321
    %v356 = vunpack.c.l.b16 %v322
    %v357 = vunpack.c.l.b16 %v323
    %v358 = vunpack.c.l.b16 %v324
    %v359 = vunpack.c.l.b16 %v325
    %v360 = vpack.c.b16 %v345, %v344
    %v361 = vpack.c.b16 %v347, %v346
    %v362 = vpack.c.b16 %v349, %v348
    %v363 = vpack.c.b16 %v351, %v350
    %v364 = vpack.c.b16 %v353, %v352
    %v365 = vpack.c.b16 %v355, %v354
    %v366 = vpack.c.b16 %v357, %v356
    %v367 = vpack.c.b16 %v359, %v358
    %376 = vmatpush.bf16.msra.mxu0 %v367
    %377 = vmatpush.bf16.msra.mxu0 %v366
    %378 = vmatpush.bf16.msra.mxu0 %v365
    %379 = vmatpush.bf16.msra.mxu0 %v364
    %380 = vmatpush.bf16.msra.mxu0 %v363
    %381 = vmatpush.bf16.msra.mxu0 %v362
    %382 = vmatpush.bf16.msra.mxu0 %v361
    %383 = vmatpush.bf16.msra.mxu0 %v360
    %384 = vmatmul.bf16.gmra.mxu0 %v308
    %v385 = vpop.f32.mrf.mxu0
    %v386 = vadd.f32 %v327, %v385
    %v387 = vpop.f32.mrf.mxu0
    %388 = vdwg.mxu0
    %v389 = vxor.u32 %v386, 2147483648
    %v390 = vmul.f32 %v389, 1.442695
    %v391 = vpow.pop %v390
    %v392 = vadd.f32 %v391, 1.0
    %v393 = vrcp.pop %v392
    %v394 = vmul.f32 %v392, %v393
    %v395 = vsub.f32 1.0, %v394
    %v396 = vmul.f32 %v393, %v395
    %v397 = vadd.f32 %v393, %v396
    %vm398 = vweird.f32 %v392
    %vm399 = vweird.f32 %v393
    %vm400 = vmor %vm398, %vm399
    %v401 = vsel %vm400, %v393, %v397
    %v402 = vand.u32 2147483647, %v392
    %vm403 = vcmp.eq.f32.partialorder %v402, 8.507059e+37
    %v404 = vand.u32 %v392, 2147483648
    %v405 = vor.u32 1.1754944e-38, %v404
    %v406 = vsel %vm403, %v405, %v401
    %v407 = vmul.f32 1.0, %v406
    %vm408 = vcmask 203776
    %409 = vst.msk [vmem:[#allocation9] sm:$0xff] %vm408, %v407
    // Predicated region
    $region26: #{tpu_custom_call.1} parent=1 // pred_check
      _
    $region27: #{tpu_custom_call.1} parent=1 // pred_check_branch
      %411 = sbr.rel (0) target = $region29
    $region28: #{tpu_custom_call.1} parent=1 // pred_region
      %413 = vsyncadd [#allocation5], 0
      %s415 = sshll.u32 [#allocation9], 4
      %s416 = int_to_ptr.vmem [resolvable:$true] %s415
      %s417 = sshll.u32 %s3, 4
      %s418 = int_to_ptr.hbm [resolvable:$true] %s417
      %420 = dma.vmem_to_hbm [thread:$0]  %s416, 128, %s418, [#allocation5]
    $region29: #{tpu_custom_call.1} parent=1 // pred_fallthru
      _
    // Predicated region
    $region30: #{tpu_custom_call.1} parent=1 // pred_check
      _
    $region31: #{tpu_custom_call.1} parent=1 // pred_check_branch
      %422 = sbr.rel (0) target = $region33
    $region32: #{tpu_custom_call.1} parent=1 // pred_region
      %424 = dma.done [#allocation5], 128
    $region33: #{tpu_custom_call.1} parent=1 // pred_fallthru
      _
    %425 = vsyncpa [#allocation4], 1
    %426 = vsyncpa [#allocation7], 1
    %427 = vsyncpa [#allocation5], 1

</llo_original>
